<compile_context>
chip_gen: v6e
topology: v6e:2x2x1
jax: 0.10.0
libtpu: 0.0.40
codegen_flags: <defaults>
</compile_context>

<pallas_src>
import math
import functools

import jax
import jax.numpy as jnp
from jax import lax
from jax.experimental import pallas as pl
from jax.experimental.pallas import tpu as pltpu

LN_EPS = 1e-5  # torch.nn.LayerNorm default


# ----------------------------- Pallas kernel -------------------------------
def ada_ln_kernel(x_ref, scale_ref, shift_ref, o_ref):
    # x_ref:     (TB, TN, D)  tile spanning TB batch rows x TN sequence rows
    # scale_ref: (TB, 1, D)   adaptive scale for these batch rows
    # shift_ref: (TB, 1, D)   adaptive shift for these batch rows
    # o_ref:     (TB, TN, D)
    x = x_ref[...].astype(jnp.float32)                      # (TB, TN, D)
    d_inv = 1.0 / x.shape[-1]

    # Two-pass statistics in f32 (tile already resident in VMEM -> free HBM-wise).
    mean = jnp.sum(x, axis=-1, keepdims=True) * d_inv       # (TB, TN, 1)
    xc = x - mean
    var = jnp.sum(xc * xc, axis=-1, keepdims=True) * d_inv  # (TB, TN, 1)
    xn = xc * lax.rsqrt(var + LN_EPS)                       # (TB, TN, D)

    scale = scale_ref[...].astype(jnp.float32)              # (TB, 1, D) broadcast
    shift = shift_ref[...].astype(jnp.float32)
    o_ref[...] = (xn * (1.0 + scale) + shift).astype(o_ref.dtype)


# ------------------------------- helpers ------------------------------------
def sinusoidal_pos_emb(timestep, dim, num_steps, rescale_steps=4000.0):
    # Matches SinusoidalPosEmb.forward exactly (float32 math).
    t = timestep.astype(jnp.float32) / float(num_steps) * float(rescale_steps)
    half_dim = dim // 2
    freq = math.log(10000.0) / (half_dim - 1)
    freqs = jnp.exp(jnp.arange(half_dim, dtype=jnp.float32) * -freq)
    arg = t[:, None] * freqs[None, :]
    return jnp.concatenate([jnp.sin(arg), jnp.cos(arg)], axis=-1)  # (B, dim)


def _vmem_capacity_bytes():
    """Physical VMEM per core; generation-aware with a safe fallback."""
    try:
        info = pltpu.get_tpu_info()
        cap = int(getattr(info, "vmem_capacity_bytes"))
        if cap > 0:
            return cap
    except Exception:
        pass
    return 64 << 20  # conservative (v7x-sized) fallback


def _choose_tiles(b, n, d, itemsize, target_bytes):
    """Pick (TB, TN): TN sublane-packed for the dtype, TB packs small batches."""
    # Sublane packing: 8 rows for 4-byte, 16 for 2-byte, 32 for 1-byte dtypes.
    pack = max(8, 32 // max(itemsize, 1))
    row_bytes = d * itemsize
    tn = (target_bytes // max(row_bytes, 1)) // pack * pack
    tn = max(pack, int(tn))
    if tn >= n:
        tn = n                     # full extent: always a legal block shape
    n_tiles = -(-n // tn)          # ceil div (python ints)

    tb = 1
    if n_tiles == 1:
        # Whole batch row fits well under target -> pack batch rows per step.
        slab = n * row_bytes
        want = max(1, int(target_bytes // max(slab, 1)))
        for cand in range(min(b, want), 0, -1):
            if b % cand == 0:      # keep the grid exact / megacore-balanced
                tb = cand
                break
    return tb, tn


# ------------------------------- wrapper ------------------------------------
@functools.partial(jax.jit, static_argnames=("num_steps",))
def ada_layer_norm(x, timestep, w, b, *, num_steps):
    """x: (B, N, D); timestep: (B,) int32; w: (D, 2D); b: (2D,).

    Equivalent to AdaLayerNorm.forward with emb_type='adalayernorm_abs'.
    """
    B, N, D = x.shape
    assert D % 2 == 0, "sinusoidal embedding needs even D"
    assert D % 128 == 0, "D must be lane-dense (multiple of 128)"  # TODO(synk): pad small D

    # --- glue (plain JAX): timestep embedding, SiLU, Linear(D -> 2D) ---------
    emb = sinusoidal_pos_emb(timestep, D, num_steps)                 # (B, D) f32
    h = emb * jax.nn.sigmoid(emb)                                    # SiLU
    proj = jnp.dot(h, w, preferred_element_type=jnp.float32) + b     # (B, 2D)
    scale = proj[:, :D].reshape(B, 1, D)                             # (B, 1, D)
    shift = proj[:, D:].reshape(B, 1, D)                             # (B, 1, D)

    # --- Pallas kernel: LayerNorm + adaptive scale/shift ---------------------
    itemsize = jnp.dtype(x.dtype).itemsize
    vmem_cap = _vmem_capacity_bytes()
    # ~4 MiB tiles on v7x (64 MiB VMEM), ~8 MiB on v5e/v6e (128 MiB VMEM).
    target_bytes = int(min(max(vmem_cap // 16, 2 << 20), 8 << 20))
    tb, tn = _choose_tiles(B, N, D, itemsize, target_bytes)
    b_tiles = B // tb
    n_tiles = pl.cdiv(N, tn)

    # VMEM budget: double-buffered x tile + out tile + scale/shift blocks,
    # capped at 3/4 of physical VMEM (48 MiB v7x, 96 MiB v5e/v6e) for headroom.
    tile_bytes = tb * tn * D * itemsize
    ss_bytes = 2 * tb * D * 4
    need = 2 * (2 * tile_bytes) + 2 * ss_bytes
    vmem_limit = int(min(max(2 * need, 16 << 20), (vmem_cap * 3) // 4))

    return pl.pallas_call(
        ada_ln_kernel,
        out_shape=jax.ShapeDtypeStruct((B, N, D), x.dtype),
        grid_spec=pltpu.PrefetchScalarGridSpec(
            num_scalar_prefetch=0,
            grid=(b_tiles, n_tiles),
            in_specs=[
                pl.BlockSpec((tb, tn, D), lambda bi, ni: (bi, ni, 0)),  # x tile
                pl.BlockSpec((tb, 1, D), lambda bi, ni: (bi, 0, 0)),    # scale
                pl.BlockSpec((tb, 1, D), lambda bi, ni: (bi, 0, 0)),    # shift
            ],
            out_specs=pl.BlockSpec((tb, tn, D), lambda bi, ni: (bi, ni, 0)),
        ),
        compiler_params=pltpu.CompilerParams(
            dimension_semantics=("parallel", "parallel"),
            vmem_limit_bytes=vmem_limit),
    )(x, scale, shift)


# ---------------------------- pure-JAX reference ----------------------------
def ada_layer_norm_ref(x, timestep, w, b, *, num_steps):
    D = x.shape[-1]
    emb = sinusoidal_pos_emb(timestep, D, num_steps)
    h = emb * jax.nn.sigmoid(emb)
    proj = h @ w + b                                              # (B, 2D)
    scale = proj[:, None, :D]
    shift = proj[:, None, D:]
    xf = x.astype(jnp.float32)
    mean = jnp.mean(xf, axis=-1, keepdims=True)
    var = jnp.mean((xf - mean) ** 2, axis=-1, keepdims=True)
    xn = (xf - mean) * lax.rsqrt(var + LN_EPS)
    return (xn * (1.0 + scale) + shift).astype(x.dtype)


# --------------------------------- main --------------------------------------
if __name__ == "__main__":
    B, N, D = 2, 64, 128          # small but lane-dense (D multiple of 128)
    DIFFUSION_STEPS = 100

    key = jax.random.PRNGKey(0)
    kx, kt, kw, kb = jax.random.split(key, 4)

    x = jax.random.normal(kx, (B, N, D), dtype=jnp.float32)
    timestep = jax.random.randint(kt, (B,), 0, DIFFUSION_STEPS, dtype=jnp.int32)

    # nn.Linear(D, 2D): stored as W (D, 2D) for the x @ W convention.
    bound = 1.0 / math.sqrt(D)
    w = jax.random.uniform(kw, (D, 2 * D), jnp.float32, -bound, bound)
    b = jax.random.uniform(kb, (2 * D,), jnp.float32, -bound, bound)

    out = ada_layer_norm(x, timestep, w, b, num_steps=DIFFUSION_STEPS)
    out = jax.block_until_ready(out)

    ref = ada_layer_norm_ref(x, timestep, w, b, num_steps=DIFFUSION_STEPS)
    assert out.shape == (B, N, D)
    assert jnp.allclose(out, ref, atol=1e-4, rtol=1e-4), "mismatch vs reference"

    print("KERNEL_OK")
</pallas_src>

<mosaic_0001>
module attributes {stable_mosaic.version = 11 : i64} {
  func.func @ada_ln_kernel(%arg0: i32, %arg1: i32, %arg2: memref<2x64x128xf32, #tpu.memory_space<vmem>>, %arg3: memref<2x1x128xf32, #tpu.memory_space<vmem>>, %arg4: memref<2x1x128xf32, #tpu.memory_space<vmem>>, %arg5: memref<2x64x128xf32, #tpu.memory_space<vmem>>) attributes {dimension_semantics = [#tpu.dimension_semantics<parallel>, #tpu.dimension_semantics<parallel>], iteration_bounds = array<i64: 1, 1>, scalar_prefetch = 0 : i64, scratch_operands = 0 : i64, tpu.core_type = #tpu.core_type<tc>, window_params = [{transform_indices = @transform_0, window_bounds = array<i64: 2, 64, 128>}, {transform_indices = @transform_1, window_bounds = array<i64: 2, 1, 128>}, {transform_indices = @transform_2, window_bounds = array<i64: 2, 1, 128>}, {transform_indices = @transform_3, window_bounds = array<i64: 2, 64, 128>}]} {
    %c0 = arith.constant 0 : index
    %c0_0 = arith.constant 0 : index
    %c0_1 = arith.constant 0 : index
    %0 = vector.load %arg2[%c0, %c0_0, %c0_1] : memref<2x64x128xf32, #tpu.memory_space<vmem>>, vector<2x64x128xf32>
    %cst = arith.constant dense<0.000000e+00> : vector<2x64xf32>
    %1 = vector.multi_reduction <add>, %0, %cst [2] : vector<2x64x128xf32> to vector<2x64xf32>
    %2 = vector.shape_cast %1 : vector<2x64xf32> to vector<2x64x1xf32>
    %cst_2 = arith.constant 7.812500e-03 : f32
    %3 = vector.broadcast %cst_2 : f32 to vector<2x64x1xf32>
    %4 = arith.mulf %2, %3 : vector<2x64x1xf32>
    %5 = vector.broadcast %4 : vector<2x64x1xf32> to vector<2x64x128xf32>
    %6 = arith.subf %0, %5 : vector<2x64x128xf32>
    %7 = arith.mulf %6, %6 : vector<2x64x128xf32>
    %cst_3 = arith.constant dense<0.000000e+00> : vector<2x64xf32>
    %8 = vector.multi_reduction <add>, %7, %cst_3 [2] : vector<2x64x128xf32> to vector<2x64xf32>
    %9 = vector.shape_cast %8 : vector<2x64xf32> to vector<2x64x1xf32>
    %cst_4 = arith.constant 7.812500e-03 : f32
    %10 = vector.broadcast %cst_4 : f32 to vector<2x64x1xf32>
    %11 = arith.mulf %9, %10 : vector<2x64x1xf32>
    %cst_5 = arith.constant 9.99999974E-6 : f32
    %12 = vector.broadcast %cst_5 : f32 to vector<2x64x1xf32>
    %13 = arith.addf %11, %12 : vector<2x64x1xf32>
    %14 = math.rsqrt %13 : vector<2x64x1xf32>
    %15 = vector.broadcast %14 : vector<2x64x1xf32> to vector<2x64x128xf32>
    %16 = arith.mulf %6, %15 : vector<2x64x128xf32>
    %c0_6 = arith.constant 0 : index
    %c0_7 = arith.constant 0 : index
    %c0_8 = arith.constant 0 : index
    %17 = vector.load %arg3[%c0_6, %c0_7, %c0_8] : memref<2x1x128xf32, #tpu.memory_space<vmem>>, vector<2x1x128xf32>
    %c0_9 = arith.constant 0 : index
    %c0_10 = arith.constant 0 : index
    %c0_11 = arith.constant 0 : index
    %18 = vector.load %arg4[%c0_9, %c0_10, %c0_11] : memref<2x1x128xf32, #tpu.memory_space<vmem>>, vector<2x1x128xf32>
    %cst_12 = arith.constant 1.000000e+00 : f32
    %19 = vector.broadcast %cst_12 : f32 to vector<2x1x128xf32>
    %20 = arith.addf %19, %17 : vector<2x1x128xf32>
    %21 = vector.broadcast %20 : vector<2x1x128xf32> to vector<2x64x128xf32>
    %22 = arith.mulf %16, %21 : vector<2x64x128xf32>
    %23 = vector.broadcast %18 : vector<2x1x128xf32> to vector<2x64x128xf32>
    %24 = arith.addf %22, %23 : vector<2x64x128xf32>
    %c0_13 = arith.constant 0 : index
    %c0_14 = arith.constant 0 : index
    %c0_15 = arith.constant 0 : index
    %25 = vector.load %arg5[%c0_13, %c0_14, %c0_15] : memref<2x64x128xf32, #tpu.memory_space<vmem>>, vector<2x64x128xf32>
    tpu.vector_store %arg5[%c0_13, %c0_14, %c0_15], %24 {strides = array<i32>} : memref<2x64x128xf32, #tpu.memory_space<vmem>>, vector<2x64x128xf32>,
    return
  }
  func.func @transform_0(%arg0: i32, %arg1: i32) -> (i32, i32, i32) {
    %c0_i32 = arith.constant 0 : i32
    %c0_i32_0 = arith.constant 0 : i32
    return %arg0, %arg1, %c0_i32 : i32, i32, i32
  }
  func.func @transform_1(%arg0: i32, %arg1: i32) -> (i32, i32, i32) {
    %c0_i32 = arith.constant 0 : i32
    %c0_i32_0 = arith.constant 0 : i32
    %c0_i32_1 = arith.constant 0 : i32
    return %arg0, %c0_i32, %c0_i32_0 : i32, i32, i32
  }
  func.func @transform_2(%arg0: i32, %arg1: i32) -> (i32, i32, i32) {
    %c0_i32 = arith.constant 0 : i32
    %c0_i32_0 = arith.constant 0 : i32
    %c0_i32_1 = arith.constant 0 : i32
    return %arg0, %c0_i32, %c0_i32_0 : i32, i32, i32
  }
  func.func @transform_3(%arg0: i32, %arg1: i32) -> (i32, i32, i32) {
    %c0_i32 = arith.constant 0 : i32
    %c0_i32_0 = arith.constant 0 : i32
    return %arg0, %arg1, %c0_i32 : i32, i32, i32
  }
}

</mosaic_0001>

<llo_original>
// kernel: ada_layer_norm.1
$region0: #{ada_layer_norm.1}
  #allocation0 [shape = 'u32[]', space=smem, size = 0x4, offset = 0x4, fixed_abs, tag = 'smem constant byte address 0x4 - core index']
  #allocation1 [shape = 'u32[144,128]{1,0:T(1,128)}', space=vmem, size = 0x12000, scoped, tag = 'internal scratch']
  %s0 = inlined_call_operand.vmem [shape: f32[2,64,128], index: 0, kind: input, shape index: {}]
  %s1 = inlined_call_operand.vmem [shape: f32[2,1,128], index: 1, kind: input, shape index: {}]
  %s2 = inlined_call_operand.vmem [shape: f32[2,1,128], index: 2, kind: input, shape index: {}]
  %s3 = inlined_call_operand.hbm [shape: f32[2,64,128], index: 3, kind: output, shape index: {}]
  %s4 = sld [smem:[#allocation0]]
  $region22: #{ada_layer_norm.1} parent=0
    _
  %s6 = ssub.s32 1, %s4
  %s7 = scalar_select 0, %s6, %s4
  $region1: #{ada_layer_norm.1} parent=0
    #allocation2 [shape = 'u8[65536]{0}', space=vmem, size = 0x10000, scoped, tag = 'output window, operand 0, single buffered']
    #allocation3 [shape = 's32[1]{0}', space=sflag, size = 0x4, scoped, tag = 'scoped memory for ada_layer_norm.1']
    %8 = vsyncpa [#allocation3], 0
    // Predicated region
    $region2: #{ada_layer_norm.1} parent=1 // pred_check
      _
    $region3: #{ada_layer_norm.1} parent=1 // pred_check_branch
      %10 = sbr.rel (0) target = $region5
    $region4: #{ada_layer_norm.1} parent=1 // pred_region
      _
    $region5: #{ada_layer_norm.1} parent=1 // pred_fallthru
      _
    // Predicated region
    $region6: #{ada_layer_norm.1} parent=1 // pred_check
      _
    $region7: #{ada_layer_norm.1} parent=1 // pred_check_branch
      %12 = sbr.rel (0) target = $region9
    $region8: #{ada_layer_norm.1} parent=1 // pred_region
      _
    $region9: #{ada_layer_norm.1} parent=1 // pred_fallthru
      _
    // Predicated region
    $region10: #{ada_layer_norm.1} parent=1 // pred_check
      _
    $region11: #{ada_layer_norm.1} parent=1 // pred_check_branch
      %14 = sbr.rel (0) target = $region13
    $region12: #{ada_layer_norm.1} parent=1 // pred_region
      _
    $region13: #{ada_layer_norm.1} parent=1 // pred_fallthru
      _
    %v15 = vld [vmem:[%s0] sm:$0xff]
    %v16 = vld [vmem:[%s0 + $0x8] sm:$0xff]
    %v17 = vld [vmem:[%s0 + $0x10] sm:$0xff]
    %v18 = vld [vmem:[%s0 + $0x18] sm:$0xff]
    %v19 = vld [vmem:[%s0 + $0x20] sm:$0xff]
    %v20 = vld [vmem:[%s0 + $0x28] sm:$0xff]
    %v21 = vld [vmem:[%s0 + $0x30] sm:$0xff]
    %v22 = vld [vmem:[%s0 + $0x38] sm:$0xff]
    %v23 = vld [vmem:[%s0 + $0x40] sm:$0xff]
    %v24 = vld [vmem:[%s0 + $0x48] sm:$0xff]
    %v25 = vld [vmem:[%s0 + $0x50] sm:$0xff]
    %v26 = vld [vmem:[%s0 + $0x58] sm:$0xff]
    %v27 = vld [vmem:[%s0 + $0x60] sm:$0xff]
    %v28 = vld [vmem:[%s0 + $0x68] sm:$0xff]
    %v29 = vld [vmem:[%s0 + $0x70] sm:$0xff]
    %v30 = vld [vmem:[%s0 + $0x78] sm:$0xff]
    %31 = vadd.xlane.f32.xlu0 %v15
    %v32 = vpop.xlane.xlu0 %31
    %33 = vadd.xlane.f32.xlu0 %v16
    %v34 = vpop.xlane.xlu0 %33
    %35 = vadd.xlane.f32.xlu0 %v17
    %v36 = vpop.xlane.xlu0 %35
    %37 = vadd.xlane.f32.xlu0 %v18
    %v38 = vpop.xlane.xlu0 %37
    %39 = vadd.xlane.f32.xlu0 %v19
    %v40 = vpop.xlane.xlu0 %39
    %41 = vadd.xlane.f32.xlu0 %v20
    %v42 = vpop.xlane.xlu0 %41
    %43 = vadd.xlane.f32.xlu0 %v21
    %v44 = vpop.xlane.xlu0 %43
    %45 = vadd.xlane.f32.xlu0 %v22
    %v46 = vpop.xlane.xlu0 %45
    %47 = vadd.xlane.f32.xlu0 %v23
    %v48 = vpop.xlane.xlu0 %47
    %49 = vadd.xlane.f32.xlu0 %v24
    %v50 = vpop.xlane.xlu0 %49
    %51 = vadd.xlane.f32.xlu0 %v25
    %v52 = vpop.xlane.xlu0 %51
    %53 = vadd.xlane.f32.xlu0 %v26
    %v54 = vpop.xlane.xlu0 %53
    %55 = vadd.xlane.f32.xlu0 %v27
    %v56 = vpop.xlane.xlu0 %55
    %57 = vadd.xlane.f32.xlu0 %v28
    %v58 = vpop.xlane.xlu0 %57
    %59 = vadd.xlane.f32.xlu0 %v29
    %v60 = vpop.xlane.xlu0 %59
    %61 = vadd.xlane.f32.xlu0 %v30
    %v62 = vpop.xlane.xlu0 %61
    %v63 = vmul.f32 %v32, 0.0078125
    %v64 = vmul.f32 %v34, 0.0078125
    %v65 = vmul.f32 %v36, 0.0078125
    %v66 = vmul.f32 %v38, 0.0078125
    %v67 = vmul.f32 %v40, 0.0078125
    %v68 = vmul.f32 %v42, 0.0078125
    %v69 = vmul.f32 %v44, 0.0078125
    %v70 = vmul.f32 %v46, 0.0078125
    %v71 = vmul.f32 %v48, 0.0078125
    %v72 = vmul.f32 %v50, 0.0078125
    %v73 = vmul.f32 %v52, 0.0078125
    %v74 = vmul.f32 %v54, 0.0078125
    %v75 = vmul.f32 %v56, 0.0078125
    %v76 = vmul.f32 %v58, 0.0078125
    %v77 = vmul.f32 %v60, 0.0078125
    %v78 = vmul.f32 %v62, 0.0078125
    %v79 = vsub.f32 %v15, %v63
    %v80 = vsub.f32 %v16, %v64
    %v81 = vsub.f32 %v17, %v65
    %v82 = vsub.f32 %v18, %v66
    %v83 = vsub.f32 %v19, %v67
    %v84 = vsub.f32 %v20, %v68
    %v85 = vsub.f32 %v21, %v69
    %v86 = vsub.f32 %v22, %v70
    %v87 = vsub.f32 %v23, %v71
    %v88 = vsub.f32 %v24, %v72
    %v89 = vsub.f32 %v25, %v73
    %v90 = vsub.f32 %v26, %v74
    %v91 = vsub.f32 %v27, %v75
    %v92 = vsub.f32 %v28, %v76
    %v93 = vsub.f32 %v29, %v77
    %v94 = vsub.f32 %v30, %v78
    %v95 = vmul.f32 %v79, %v79
    %v96 = vmul.f32 %v80, %v80
    %v97 = vmul.f32 %v81, %v81
    %v98 = vmul.f32 %v82, %v82
    %v99 = vmul.f32 %v83, %v83
    %v100 = vmul.f32 %v84, %v84
    %v101 = vmul.f32 %v85, %v85
    %v102 = vmul.f32 %v86, %v86
    %v103 = vmul.f32 %v87, %v87
    %v104 = vmul.f32 %v88, %v88
    %v105 = vmul.f32 %v89, %v89
    %v106 = vmul.f32 %v90, %v90
    %v107 = vmul.f32 %v91, %v91
    %v108 = vmul.f32 %v92, %v92
    %v109 = vmul.f32 %v93, %v93
    %v110 = vmul.f32 %v94, %v94
    %111 = vadd.xlane.f32.xlu0 %v95
    %v112 = vpop.xlane.xlu0 %111
    %113 = vadd.xlane.f32.xlu0 %v96
    %v114 = vpop.xlane.xlu0 %113
    %115 = vadd.xlane.f32.xlu0 %v97
    %v116 = vpop.xlane.xlu0 %115
    %117 = vadd.xlane.f32.xlu0 %v98
    %v118 = vpop.xlane.xlu0 %117
    %119 = vadd.xlane.f32.xlu0 %v99
    %v120 = vpop.xlane.xlu0 %119
    %121 = vadd.xlane.f32.xlu0 %v100
    %v122 = vpop.xlane.xlu0 %121
    %123 = vadd.xlane.f32.xlu0 %v101
    %v124 = vpop.xlane.xlu0 %123
    %125 = vadd.xlane.f32.xlu0 %v102
    %v126 = vpop.xlane.xlu0 %125
    %127 = vadd.xlane.f32.xlu0 %v103
    %v128 = vpop.xlane.xlu0 %127
    %129 = vadd.xlane.f32.xlu0 %v104
    %v130 = vpop.xlane.xlu0 %129
    %131 = vadd.xlane.f32.xlu0 %v105
    %v132 = vpop.xlane.xlu0 %131
    %133 = vadd.xlane.f32.xlu0 %v106
    %v134 = vpop.xlane.xlu0 %133
    %135 = vadd.xlane.f32.xlu0 %v107
    %v136 = vpop.xlane.xlu0 %135
    %137 = vadd.xlane.f32.xlu0 %v108
    %v138 = vpop.xlane.xlu0 %137
    %139 = vadd.xlane.f32.xlu0 %v109
    %v140 = vpop.xlane.xlu0 %139
    %141 = vadd.xlane.f32.xlu0 %v110
    %v142 = vpop.xlane.xlu0 %141
    %v143 = vmul.f32 %v112, 0.0078125
    %v144 = vmul.f32 %v114, 0.0078125
    %v145 = vmul.f32 %v116, 0.0078125
    %v146 = vmul.f32 %v118, 0.0078125
    %v147 = vmul.f32 %v120, 0.0078125
    %v148 = vmul.f32 %v122, 0.0078125
    %v149 = vmul.f32 %v124, 0.0078125
    %v150 = vmul.f32 %v126, 0.0078125
    %v151 = vmul.f32 %v128, 0.0078125
    %v152 = vmul.f32 %v130, 0.0078125
    %v153 = vmul.f32 %v132, 0.0078125
    %v154 = vmul.f32 %v134, 0.0078125
    %v155 = vmul.f32 %v136, 0.0078125
    %v156 = vmul.f32 %v138, 0.0078125
    %v157 = vmul.f32 %v140, 0.0078125
    %v158 = vmul.f32 %v142, 0.0078125
    %v159 = vadd.f32 %v143, 1e-05
    %v160 = vadd.f32 %v144, 1e-05
    %v161 = vadd.f32 %v145, 1e-05
    %v162 = vadd.f32 %v146, 1e-05
    %v163 = vadd.f32 %v147, 1e-05
    %v164 = vadd.f32 %v148, 1e-05
    %v165 = vadd.f32 %v149, 1e-05
    %v166 = vadd.f32 %v150, 1e-05
    %v167 = vadd.f32 %v151, 1e-05
    %v168 = vadd.f32 %v152, 1e-05
    %v169 = vadd.f32 %v153, 1e-05
    %v170 = vadd.f32 %v154, 1e-05
    %v171 = vadd.f32 %v155, 1e-05
    %v172 = vadd.f32 %v156, 1e-05
    %v173 = vadd.f32 %v157, 1e-05
    %v174 = vadd.f32 %v158, 1e-05
    %v175 = vrsqrt.pop %v159
    %v176 = vrsqrt.pop %v160
    %v177 = vrsqrt.pop %v161
    %v178 = vrsqrt.pop %v162
    %v179 = vrsqrt.pop %v163
    %v180 = vrsqrt.pop %v164
    %v181 = vrsqrt.pop %v165
    %v182 = vrsqrt.pop %v166
    %v183 = vrsqrt.pop %v167
    %v184 = vrsqrt.pop %v168
    %v185 = vrsqrt.pop %v169
    %v186 = vrsqrt.pop %v170
    %v187 = vrsqrt.pop %v171
    %v188 = vrsqrt.pop %v172
    %v189 = vrsqrt.pop %v173
    %v190 = vrsqrt.pop %v174
    %v191 = vmul.f32 %v79, %v175
    %v192 = vmul.f32 %v80, %v176
    %v193 = vmul.f32 %v81, %v177
    %v194 = vmul.f32 %v82, %v178
    %v195 = vmul.f32 %v83, %v179
    %v196 = vmul.f32 %v84, %v180
    %v197 = vmul.f32 %v85, %v181
    %v198 = vmul.f32 %v86, %v182
    %v199 = vmul.f32 %v87, %v183
    %v200 = vmul.f32 %v88, %v184
    %v201 = vmul.f32 %v89, %v185
    %v202 = vmul.f32 %v90, %v186
    %v203 = vmul.f32 %v91, %v187
    %v204 = vmul.f32 %v92, %v188
    %v205 = vmul.f32 %v93, %v189
    %v206 = vmul.f32 %v94, %v190
    %v207 = vld [vmem:[%s1] sm:$0x1]
    %v208 = vld [vmem:[%s1 + $0x1] sm:$0x1]
    %v209 = vld [vmem:[%s2] sm:$0x1]
    %v210 = vld [vmem:[%s2 + $0x1] sm:$0x1]
    %v211 = vadd.f32 %v207, 1.0
    %v212 = vadd.f32 %v208, 1.0
    %v215 = vlaneseq
    %v216 = vshrl.u32 %v215, 7
    %v217 = vsub.s32 0, %v216
    %v218 = vrot.slane %v211, %v217
    %v219 = vlaneseq
    %v220 = vshrl.u32 %v219, 7
    %v221 = vsub.s32 0, %v220
    %v222 = vrot.slane %v212, %v221
    %v225 = vmul.f32 %v191, %v218
    %v226 = vmul.f32 %v192, %v218
    %v227 = vmul.f32 %v193, %v218
    %v228 = vmul.f32 %v194, %v218
    %v229 = vmul.f32 %v195, %v218
    %v230 = vmul.f32 %v196, %v218
    %v231 = vmul.f32 %v197, %v218
    %v232 = vmul.f32 %v198, %v218
    %v233 = vmul.f32 %v199, %v222
    %v234 = vmul.f32 %v200, %v222
    %v235 = vmul.f32 %v201, %v222
    %v236 = vmul.f32 %v202, %v222
    %v237 = vmul.f32 %v203, %v222
    %v238 = vmul.f32 %v204, %v222
    %v239 = vmul.f32 %v205, %v222
    %v240 = vmul.f32 %v206, %v222
    %v243 = vlaneseq
    %v244 = vshrl.u32 %v243, 7
    %v245 = vsub.s32 0, %v244
    %v246 = vrot.slane %v209, %v245
    %v247 = vlaneseq
    %v248 = vshrl.u32 %v247, 7
    %v249 = vsub.s32 0, %v248
    %v250 = vrot.slane %v210, %v249
    %v253 = vadd.f32 %v225, %v246
    %v254 = vadd.f32 %v226, %v246
    %v255 = vadd.f32 %v227, %v246
    %v256 = vadd.f32 %v228, %v246
    %v257 = vadd.f32 %v229, %v246
    %v258 = vadd.f32 %v230, %v246
    %v259 = vadd.f32 %v231, %v246
    %v260 = vadd.f32 %v232, %v246
    %v261 = vadd.f32 %v233, %v250
    %v262 = vadd.f32 %v234, %v250
    %v263 = vadd.f32 %v235, %v250
    %v264 = vadd.f32 %v236, %v250
    %v265 = vadd.f32 %v237, %v250
    %v266 = vadd.f32 %v238, %v250
    %v267 = vadd.f32 %v239, %v250
    %v268 = vadd.f32 %v240, %v250
    %269 = vst [vmem:[#allocation2] sm:$0xff] %v253
    %270 = vst [vmem:[#allocation2 + $0x8] sm:$0xff] %v254
    %271 = vst [vmem:[#allocation2 + $0x10] sm:$0xff] %v255
    %272 = vst [vmem:[#allocation2 + $0x18] sm:$0xff] %v256
    %273 = vst [vmem:[#allocation2 + $0x20] sm:$0xff] %v257
    %274 = vst [vmem:[#allocation2 + $0x28] sm:$0xff] %v258
    %275 = vst [vmem:[#allocation2 + $0x30] sm:$0xff] %v259
    %276 = vst [vmem:[#allocation2 + $0x38] sm:$0xff] %v260
    %277 = vst [vmem:[#allocation2 + $0x40] sm:$0xff] %v261
    %278 = vst [vmem:[#allocation2 + $0x48] sm:$0xff] %v262
    %279 = vst [vmem:[#allocation2 + $0x50] sm:$0xff] %v263
    %280 = vst [vmem:[#allocation2 + $0x58] sm:$0xff] %v264
    %281 = vst [vmem:[#allocation2 + $0x60] sm:$0xff] %v265
    %282 = vst [vmem:[#allocation2 + $0x68] sm:$0xff] %v266
    %283 = vst [vmem:[#allocation2 + $0x70] sm:$0xff] %v267
    %284 = vst [vmem:[#allocation2 + $0x78] sm:$0xff] %v268
    // Predicated region
    $region14: #{ada_layer_norm.1} parent=1 // pred_check
      _
    $region15: #{ada_layer_norm.1} parent=1 // pred_check_branch
      %286 = sbr.rel (0) target = $region17
    $region16: #{ada_layer_norm.1} parent=1 // pred_region
      %s288 = ssub.s32 2048, 2048
      %289 = vsyncadd [#allocation3], %s288
      %s290 = sshll.u32 [#allocation2], 4
      %s291 = int_to_ptr.vmem [resolvable:$true] %s290
      %296 = dma.vmem_to_hbm [thread:$0]  %s291, 2048, %s3, [#allocation3], 128, 128, 8
    $region17: #{ada_layer_norm.1} parent=1 // pred_fallthru
      _
    // Predicated region
    $region18: #{ada_layer_norm.1} parent=1 // pred_check
      _
    $region19: #{ada_layer_norm.1} parent=1 // pred_check_branch
      %298 = sbr.rel (0) target = $region21
    $region20: #{ada_layer_norm.1} parent=1 // pred_region
      %299 = dma.done [#allocation3], 2048
    $region21: #{ada_layer_norm.1} parent=1 // pred_fallthru
      _
    %300 = vsyncpa [#allocation3], 1

</llo_original>
